<compile_context>
chip_gen: v5e
topology: v5e:2x2
jax: 0.10.0
libtpu: 0.0.40
codegen_flags: <defaults>
</compile_context>

<pallas_src>
import jax
import jax.numpy as jnp
from jax.experimental import pallas as pl
from jax.experimental.pallas import tpu as pltpu


def _gelu(x):
    # TODO(synk): PyTorch nn.GELU default is erf-exact; tanh-approx GELU is used
    # in-kernel (guaranteed Mosaic lowering).  Divergence is ~1e-3 level.
    return jax.nn.gelu(x, approximate=True)


def _fused_mlp_kernel(x_ref, w1_ref, b1_ref, w2_ref, b2_ref, o_ref, acc_ref):
    """One (row-tile, hidden-tile) grid step of  GELU(x @ W1 + b1) @ W2 + b2."""
    h = pl.program_id(1)

    @pl.when(h == 0)
    def _init():
        acc_ref[...] = jnp.zeros_like(acc_ref)

    # fc1 tile + bias + GELU: hidden activation never leaves VMEM.
    hid = jnp.dot(x_ref[...], w1_ref[...], preferred_element_type=jnp.float32)
    hid = _gelu(hid + b1_ref[...].astype(jnp.float32))

    # fc2 partial product, accumulated over hidden tiles in f32.
    acc_ref[...] += jnp.dot(hid.astype(w2_ref.dtype), w2_ref[...],
                            preferred_element_type=jnp.float32)

    @pl.when(h == pl.num_programs(1) - 1)
    def _finalize():
        o_ref[...] = (acc_ref[...] + b2_ref[...].astype(jnp.float32)).astype(o_ref.dtype)


def _round_up(x, m):
    return (x + m - 1) // m * m


def fused_mlp(x, w1, b1, w2, b2, *, tm=256, th=512, out_dtype=None,
              vmem_limit_bytes=48 * 1024 * 1024):
    """Fused ViT MLP:  fc2(GELU(fc1(x))).  Dropout is identity (eval mode).

    x:  (..., D_in)
    w1: (D_in, D_hid)  pre-transposed (PyTorch nn.Linear stores (out, in))
    b1: (D_hid,)
    w2: (D_hid, D_out)
    b2: (D_out,)
    """
    orig_shape = x.shape
    d_in = orig_shape[-1]
    d_hid = w1.shape[1]
    d_out = w2.shape[1]
    assert w1.shape == (d_in, d_hid) and w2.shape == (d_hid, d_out)
    assert b1.shape == (d_hid,) and b2.shape == (d_out,)
    out_dtype = out_dtype or x.dtype

    x2 = x.reshape(-1, d_in)
    m = x2.shape[0]

    # Row tile: a multiple of 8 (sublane) or the whole (padded) row extent.
    tm = min(tm, _round_up(m, 8))
    m_pad = _round_up(m, tm)
    if m_pad != m:
        x2 = jnp.pad(x2, ((0, m_pad - m), (0, 0)))

    # Hidden tile: full hidden if small, otherwise a 128-aligned divisor.
    if d_hid <= th:
        th = d_hid
    else:
        assert d_hid % th == 0 and th % 128 == 0, "hidden tile must be a 128-aligned divisor"

    grid = (m_pad // tm, d_hid // th)

    out = pl.pallas_call(
        _fused_mlp_kernel,
        out_shape=jax.ShapeDtypeStruct((m_pad, d_out), out_dtype),
        grid=grid,
        in_specs=[
            pl.BlockSpec((tm, d_in), lambda i, h: (i, 0)),   # x rows
            pl.BlockSpec((d_in, th), lambda i, h: (0, h)),   # W1 column tile
            pl.BlockSpec((1, th),    lambda i, h: (0, h)),   # b1 tile
            pl.BlockSpec((th, d_out), lambda i, h: (h, 0)),  # W2 row tile
            pl.BlockSpec((1, d_out), lambda i, h: (0, 0)),   # b2
        ],
        out_specs=pl.BlockSpec((tm, d_out), lambda i, h: (i, 0)),  # invariant over h -> accumulator
        scratch_shapes=[pltpu.VMEM((tm, d_out), jnp.float32)],
        compiler_params=pltpu.CompilerParams(
            dimension_semantics=("parallel", "arbitrary"),
            vmem_limit_bytes=vmem_limit_bytes,
        ),
    )(x2, w1, b1.reshape(1, d_hid), w2, b2.reshape(1, d_out))

    if m_pad != m:
        out = out[:m]
    return out.reshape(*orig_shape[:-1], d_out)


def _ref_mlp(x, w1, b1, w2, b2):
    # Pure-JAX reference (same tanh-approx GELU; Dropout identity in eval).
    return jnp.dot(jax.nn.gelu(jnp.dot(x, w1) + b1, approximate=True), w2) + b2


if __name__ == "__main__":
    key = jax.random.PRNGKey(0)

    # --- small demo consistent with the module: tokens (B, N, C), mlp_ratio = 4 ---
    B, N, D = 2, 16, 32
    HID = 4 * D
    kx, k1, k2, k3, k4, key = jax.random.split(key, 6)
    x = jax.random.normal(kx, (B, N, D), jnp.float32)
    w1 = 0.02 * jax.random.normal(k1, (D, HID), jnp.float32)
    b1 = 0.01 * jax.random.normal(k2, (HID,), jnp.float32)
    w2 = 0.02 * jax.random.normal(k3, (HID, D), jnp.float32)
    b2 = 0.01 * jax.random.normal(k4, (D,), jnp.float32)

    y = fused_mlp(x, w1, b1, w2, b2)
    jax.block_until_ready(y)
    assert y.shape == (B, N, D) and y.dtype == jnp.float32
    ref = _ref_mlp(x, w1, b1, w2, b2)
    assert jnp.allclose(y, ref, atol=1e-5, rtol=1e-5), float(jnp.max(jnp.abs(y - ref)))

    # --- second check exercising the multi-tile path (row tiles + hidden reduction) ---
    M2, D2 = 512, 256
    HID2 = 4 * D2
    kx, k1, k2, k3, k4, key = jax.random.split(key, 6)
    x2 = jax.random.normal(kx, (M2, D2), jnp.float32)
    w1b = 0.02 * jax.random.normal(k1, (D2, HID2), jnp.float32)
    b1b = 0.01 * jax.random.normal(k2, (HID2,), jnp.float32)
    w2b = 0.02 * jax.random.normal(k3, (HID2, D2), jnp.float32)
    b2b = 0.01 * jax.random.normal(k4, (D2,), jnp.float32)

    y2 = fused_mlp(x2, w1b, b1b, w2b, b2b, tm=256, th=512)   # grid = (2, 2)
    jax.block_until_ready(y2)
    ref2 = _ref_mlp(x2, w1b, b1b, w2b, b2b)
    assert jnp.allclose(y2, ref2, atol=1e-4, rtol=1e-4), float(jnp.max(jnp.abs(y2 - ref2)))

    print("KERNEL_OK")
</pallas_src>

<mosaic_0001>
module attributes {stable_mosaic.version = 11 : i64} {
  func.func @_fused_mlp_kernel(%arg0: i32, %arg1: i32, %arg2: memref<32x32xf32, #tpu.memory_space<vmem>>, %arg3: memref<32x128xf32, #tpu.memory_space<vmem>>, %arg4: memref<1x128xf32, #tpu.memory_space<vmem>>, %arg5: memref<128x32xf32, #tpu.memory_space<vmem>>, %arg6: memref<1x32xf32, #tpu.memory_space<vmem>>, %arg7: memref<32x32xf32, #tpu.memory_space<vmem>>, %arg8: memref<32x32xf32, #tpu.memory_space<vmem>>) attributes {dimension_semantics = [#tpu.dimension_semantics<parallel>, #tpu.dimension_semantics<arbitrary>], iteration_bounds = array<i64: 1, 1>, scalar_prefetch = 0 : i64, scratch_operands = 1 : i64, tpu.core_type = #tpu.core_type<tc>, window_params = [{transform_indices = @transform_0, window_bounds = array<i64: 32, 32>}, {transform_indices = @transform_1, window_bounds = array<i64: 32, 128>}, {transform_indices = @transform_2, window_bounds = array<i64: 1, 128>}, {transform_indices = @transform_3, window_bounds = array<i64: 128, 32>}, {pipeline_mode = #tpu.pipeline_mode<synchronous>, transform_indices = @transform_4, window_bounds = array<i64: 1, 32>}, {transform_indices = @transform_5, window_bounds = array<i64: 32, 32>}]} {
    %c0_i32 = arith.constant 0 : i32
    %0 = arith.cmpi eq, %arg1, %c0_i32 : i32
    %1 = arith.extui %0 : i1 to i32
    %c0_i32_0 = arith.constant 0 : i32
    %2 = arith.cmpi ne, %1, %c0_i32_0 : i32
    scf.if %2 {
      %cst_19 = arith.constant 0.000000e+00 : f32
      %30 = vector.broadcast %cst_19 : f32 to vector<32x32xf32>
      %c0_20 = arith.constant 0 : index
      %c0_21 = arith.constant 0 : index
      %31 = vector.load %arg8[%c0_20, %c0_21] : memref<32x32xf32, #tpu.memory_space<vmem>>, vector<32x32xf32>
      tpu.vector_store %arg8[%c0_20, %c0_21], %30 {strides = array<i32>} : memref<32x32xf32, #tpu.memory_space<vmem>>, vector<32x32xf32>,
    } else {
    }
    %c0 = arith.constant 0 : index
    %c0_1 = arith.constant 0 : index
    %3 = vector.load %arg2[%c0, %c0_1] : memref<32x32xf32, #tpu.memory_space<vmem>>, vector<32x32xf32>
    %c0_2 = arith.constant 0 : index
    %c0_3 = arith.constant 0 : index
    %4 = vector.load %arg3[%c0_2, %c0_3] : memref<32x128xf32, #tpu.memory_space<vmem>>, vector<32x128xf32>
    %cst = arith.constant dense<0.000000e+00> : vector<32x128xf32>
    %5 = tpu.matmul %3, %4, %cst {dimension_numbers = #tpu.dot_dimension_numbers<[1], [0], [0], [1], [0, 0, 1, 1], [], []>} : vector<32x32xf32>, vector<32x128xf32>, vector<32x128xf32> -> vector<32x128xf32>
    %c0_4 = arith.constant 0 : index
    %c0_5 = arith.constant 0 : index
    %6 = vector.load %arg4[%c0_4, %c0_5] : memref<1x128xf32, #tpu.memory_space<vmem>>, vector<1x128xf32>
    %7 = vector.broadcast %6 : vector<1x128xf32> to vector<32x128xf32>
    %8 = arith.addf %5, %7 : vector<32x128xf32>
    %9 = arith.mulf %8, %8 : vector<32x128xf32>
    %10 = arith.mulf %8, %9 : vector<32x128xf32>
    %cst_6 = arith.constant 4.471500e-02 : f32
    %11 = vector.broadcast %cst_6 : f32 to vector<32x128xf32>
    %12 = arith.mulf %11, %10 : vector<32x128xf32>
    %13 = arith.addf %8, %12 : vector<32x128xf32>
    %cst_7 = arith.constant 0.797884583 : f32
    %14 = vector.broadcast %cst_7 : f32 to vector<32x128xf32>
    %15 = arith.mulf %14, %13 : vector<32x128xf32>
    %16 = math.tanh %15 : vector<32x128xf32>
    %cst_8 = arith.constant 1.000000e+00 : f32
    %17 = vector.broadcast %cst_8 : f32 to vector<32x128xf32>
    %18 = arith.addf %17, %16 : vector<32x128xf32>
    %cst_9 = arith.constant 5.000000e-01 : f32
    %19 = vector.broadcast %cst_9 : f32 to vector<32x128xf32>
    %20 = arith.mulf %19, %18 : vector<32x128xf32>
    %21 = arith.mulf %8, %20 : vector<32x128xf32>
    %c0_10 = arith.constant 0 : index
    %c0_11 = arith.constant 0 : index
    %22 = vector.load %arg8[%c0_10, %c0_11] : memref<32x32xf32, #tpu.memory_space<vmem>>, vector<32x32xf32>
    %c0_12 = arith.constant 0 : index
    %c0_13 = arith.constant 0 : index
    %23 = vector.load %arg5[%c0_12, %c0_13] : memref<128x32xf32, #tpu.memory_space<vmem>>, vector<128x32xf32>
    %cst_14 = arith.constant dense<0.000000e+00> : vector<32x32xf32>
    %24 = tpu.matmul %21, %23, %cst_14 {dimension_numbers = #tpu.dot_dimension_numbers<[1], [0], [0], [1], [0, 0, 1, 1], [], []>} : vector<32x128xf32>, vector<128x32xf32>, vector<32x32xf32> -> vector<32x32xf32>
    %25 = arith.addf %22, %24 : vector<32x32xf32>
    %c0_15 = arith.constant 0 : index
    %c0_16 = arith.constant 0 : index
    %26 = vector.load %arg8[%c0_15, %c0_16] : memref<32x32xf32, #tpu.memory_space<vmem>>, vector<32x32xf32>
    tpu.vector_store %arg8[%c0_15, %c0_16], %25 {strides = array<i32>} : memref<32x32xf32, #tpu.memory_space<vmem>>, vector<32x32xf32>,
    %c0_i32_17 = arith.constant 0 : i32
    %27 = arith.cmpi eq, %arg1, %c0_i32_17 : i32
    %28 = arith.extui %27 : i1 to i32
    %c0_i32_18 = arith.constant 0 : i32
    %29 = arith.cmpi ne, %28, %c0_i32_18 : i32
    scf.if %29 {
      %c0_19 = arith.constant 0 : index
      %c0_20 = arith.constant 0 : index
      %30 = vector.load %arg8[%c0_19, %c0_20] : memref<32x32xf32, #tpu.memory_space<vmem>>, vector<32x32xf32>
      %c0_21 = arith.constant 0 : index
      %c0_22 = arith.constant 0 : index
      %31 = vector.load %arg6[%c0_21, %c0_22] : memref<1x32xf32, #tpu.memory_space<vmem>>, vector<1x32xf32>
      %32 = vector.broadcast %31 : vector<1x32xf32> to vector<32x32xf32>
      %33 = arith.addf %30, %32 : vector<32x32xf32>
      %c0_23 = arith.constant 0 : index
      %c0_24 = arith.constant 0 : index
      %34 = vector.load %arg7[%c0_23, %c0_24] : memref<32x32xf32, #tpu.memory_space<vmem>>, vector<32x32xf32>
      tpu.vector_store %arg7[%c0_23, %c0_24], %33 {strides = array<i32>} : memref<32x32xf32, #tpu.memory_space<vmem>>, vector<32x32xf32>,
    } else {
    }
    return
  }
  func.func @transform_0(%arg0: i32, %arg1: i32) -> (i32, i32) {
    %c0_i32 = arith.constant 0 : i32
    %c0_i32_0 = arith.constant 0 : i32
    return %arg0, %c0_i32 : i32, i32
  }
  func.func @transform_1(%arg0: i32, %arg1: i32) -> (i32, i32) {
    %c0_i32 = arith.constant 0 : i32
    %c0_i32_0 = arith.constant 0 : i32
    return %c0_i32, %arg1 : i32, i32
  }
  func.func @transform_2(%arg0: i32, %arg1: i32) -> (i32, i32) {
    %c0_i32 = arith.constant 0 : i32
    %c0_i32_0 = arith.constant 0 : i32
    return %c0_i32, %arg1 : i32, i32
  }
  func.func @transform_3(%arg0: i32, %arg1: i32) -> (i32, i32) {
    %c0_i32 = arith.constant 0 : i32
    %c0_i32_0 = arith.constant 0 : i32
    return %arg1, %c0_i32 : i32, i32
  }
  func.func @transform_4(%arg0: i32, %arg1: i32) -> (i32, i32) {
    %c0_i32 = arith.constant 0 : i32
    %c0_i32_0 = arith.constant 0 : i32
    %c0_i32_1 = arith.constant 0 : i32
    return %c0_i32, %c0_i32_0 : i32, i32
  }
  func.func @transform_5(%arg0: i32, %arg1: i32) -> (i32, i32) {
    %c0_i32 = arith.constant 0 : i32
    %c0_i32_0 = arith.constant 0 : i32
    return %arg0, %c0_i32 : i32, i32
  }
}

</mosaic_0001>

<llo_original>
// kernel: tpu_custom_call.1
$region0: #{tpu_custom_call.1}
  #allocation0 [shape = 'u32[]', space=smem, size = 0x4, offset = 0x4, fixed_abs, tag = 'smem constant byte address 0x4 - core index']
  #allocation1 [shape = 'u32[72,128]{1,0:T(1,128)}', space=vmem, size = 0x9000, scoped, tag = 'internal scratch']
  #allocation2 [shape = 'f32[32,32]{1,0:T(8,128)}', space=vmem, size = 0x4000, scoped, tag = 'scratch operand']
  %s0 = inlined_call_operand.vmem [shape: f32[32,32], index: 0, kind: input, shape index: {}]
  %s1 = inlined_call_operand.vmem [shape: f32[32,128], index: 1, kind: input, shape index: {}]
  %s2 = inlined_call_operand.vmem [shape: f32[1,128], index: 2, kind: input, shape index: {}]
  %s3 = inlined_call_operand.vmem [shape: f32[128,32], index: 3, kind: input, shape index: {}]
  %s4 = inlined_call_operand.vmem [shape: f32[1,32], index: 4, kind: input, shape index: {}]
  %s5 = inlined_call_operand.hbm [shape: f32[32,32], index: 5, kind: output, shape index: {}]
  %s6 = sld [smem:[#allocation0]]
  $region38: #{tpu_custom_call.1} parent=0
    _
  %s8 = ssub.s32 1, %s6
  %s9 = scalar_select 0, %s8, %s6
  $region1: #{tpu_custom_call.1} parent=0
    #allocation3 [shape = 'u8[16384]{0}', space=vmem, size = 0x4000, scoped, tag = 'output window, operand 0, single buffered']
    #allocation4 [shape = 's32[1]{0}', space=sflag, size = 0x4, scoped, tag = 'scoped memory for tpu_custom_call.1']
    %10 = vsyncpa [#allocation4], 0
    // Predicated region
    $region2: #{tpu_custom_call.1} parent=1 // pred_check
      _
    $region3: #{tpu_custom_call.1} parent=1 // pred_check_branch
      %12 = sbr.rel (0) target = $region5
    $region4: #{tpu_custom_call.1} parent=1 // pred_region
      _
    $region5: #{tpu_custom_call.1} parent=1 // pred_fallthru
      _
    // Predicated region
    $region6: #{tpu_custom_call.1} parent=1 // pred_check
      _
    $region7: #{tpu_custom_call.1} parent=1 // pred_check_branch
      %14 = sbr.rel (0) target = $region9
    $region8: #{tpu_custom_call.1} parent=1 // pred_region
      _
    $region9: #{tpu_custom_call.1} parent=1 // pred_fallthru
      _
    // Predicated region
    $region10: #{tpu_custom_call.1} parent=1 // pred_check
      _
    $region11: #{tpu_custom_call.1} parent=1 // pred_check_branch
      %16 = sbr.rel (0) target = $region13
    $region12: #{tpu_custom_call.1} parent=1 // pred_region
      _
    $region13: #{tpu_custom_call.1} parent=1 // pred_fallthru
      _
    // Predicated region
    $region14: #{tpu_custom_call.1} parent=1 // pred_check
      _
    $region15: #{tpu_custom_call.1} parent=1 // pred_check_branch
      %18 = sbr.rel (0) target = $region17
    $region16: #{tpu_custom_call.1} parent=1 // pred_region
      _
    $region17: #{tpu_custom_call.1} parent=1 // pred_fallthru
      _
    // Predicated region
    $region18: #{tpu_custom_call.1} parent=1 // pred_check
      _
    $region19: #{tpu_custom_call.1} parent=1 // pred_check_branch
      %20 = sbr.rel (0) target = $region21
    $region20: #{tpu_custom_call.1} parent=1 // pred_region
      _
    $region21: #{tpu_custom_call.1} parent=1 // pred_fallthru
      _
    %p21 = scmp.eq.s32.totalorder 0, 0
    // Predicated region
    $region22: #{tpu_custom_call.1} parent=1 // pred_check
      %p22 = pneg %p21
    $region23: #{tpu_custom_call.1} parent=1 // pred_check_branch
      %24 = sbr.rel (%p22) target = $region25
    $region24: #{tpu_custom_call.1} parent=1 // pred_region
      %vm25 = vcmask 261120
      %26 = vst.msk [vmem:[#allocation2] sm:$0xff] %vm25, 0.0
      %27 = vst.msk [vmem:[#allocation2 + $0x8] sm:$0xff] %vm25, 0.0
      %28 = vst.msk [vmem:[#allocation2 + $0x10] sm:$0xff] %vm25, 0.0
      %29 = vst.msk [vmem:[#allocation2 + $0x18] sm:$0xff] %vm25, 0.0
    $region25: #{tpu_custom_call.1} parent=1 // pred_fallthru
      _
    %v30 = vld [vmem:[%s0] sm:$0xff]
    %v31 = vld [vmem:[%s0 + $0x8] sm:$0xff]
    %v32 = vld [vmem:[%s0 + $0x10] sm:$0xff]
    %v33 = vld [vmem:[%s0 + $0x18] sm:$0xff]
    %v34 = vld [vmem:[%s1] sm:$0xff]
    %v35 = vld [vmem:[%s1 + $0x8] sm:$0xff]
    %v36 = vld [vmem:[%s1 + $0x10] sm:$0xff]
    %v37 = vld [vmem:[%s1 + $0x18] sm:$0xff]
    %v38 = vld [vmem:[%s2] sm:$0x1]
    %v40 = vperm.slane %v38, 0
    %vm42 = vcmask 261120
    %v44 = vsel %vm42, %v30, 0
    %v47 = vsel %vm42, %v31, 0
    %v50 = vsel %vm42, %v32, 0
    %v53 = vsel %vm42, %v33, 0
    %55 = vmatpush.msra.mxu0 0.0
    %56 = vmatpush.msra.mxu0 0.0
    %57 = vmatpush.msra.mxu0 0.0
    %58 = vmatpush.msra.mxu0 0.0
    %59 = vmatpush.msra.mxu0 0.0
    %60 = vmatpush.msra.mxu0 0.0
    %61 = vmatpush.msra.mxu0 0.0
    %62 = vmatpush.msra.mxu0 0.0
    %63 = vmatpush.msra.mxu0 0.0
    %64 = vmatpush.msra.mxu0 0.0
    %65 = vmatpush.msra.mxu0 0.0
    %66 = vmatpush.msra.mxu0 0.0
    %67 = vmatpush.msra.mxu0 %v37
    %68 = vmatpush.msra.mxu0 %v36
    %69 = vmatpush.msra.mxu0 %v35
    %70 = vmatpush.msra.mxu0 %v34
    %71 = vmatmul.f32.gmra.mxu0 %v44
    %v72 = vpop.f32.mrf.mxu0
    %v73 = vadd.f32 %v40, %v72
    %74 = vmatmul.f32.gmra.mxu0 %v47
    %v75 = vpop.f32.mrf.mxu0
    %v76 = vadd.f32 %v40, %v75
    %77 = vmatmul.f32.gmra.mxu0 %v50
    %v78 = vpop.f32.mrf.mxu0
    %v79 = vadd.f32 %v40, %v78
    %80 = vmatmul.f32.gmra.mxu0 %v53
    %v81 = vpop.f32.mrf.mxu0
    %v82 = vadd.f32 %v40, %v81
    %83 = vdwg.mxu0
    %v84 = vmul.f32 %v73, %v73
    %v85 = vmul.f32 %v76, %v76
    %v86 = vmul.f32 %v79, %v79
    %v87 = vmul.f32 %v82, %v82
    %v88 = vmul.f32 %v73, %v84
    %v89 = vmul.f32 %v76, %v85
    %v90 = vmul.f32 %v79, %v86
    %v91 = vmul.f32 %v82, %v87
    %v92 = vmul.f32 %v88, 0.044715
    %v93 = vmul.f32 %v89, 0.044715
    %v94 = vmul.f32 %v90, 0.044715
    %v95 = vmul.f32 %v91, 0.044715
    %v96 = vadd.f32 %v73, %v92
    %v97 = vadd.f32 %v76, %v93
    %v98 = vadd.f32 %v79, %v94
    %v99 = vadd.f32 %v82, %v95
    %v100 = vmul.f32 %v96, 0.7978846
    %v101 = vmul.f32 %v97, 0.7978846
    %v102 = vmul.f32 %v98, 0.7978846
    %v103 = vmul.f32 %v99, 0.7978846
    %v104 = vtanh.pop %v100
    %v105 = vtanh.pop %v101
    %v106 = vtanh.pop %v102
    %v107 = vtanh.pop %v103
    %v108 = vadd.f32 %v104, 1.0
    %v109 = vadd.f32 %v105, 1.0
    %v110 = vadd.f32 %v106, 1.0
    %v111 = vadd.f32 %v107, 1.0
    %v112 = vmul.f32 %v108, 0.5
    %v113 = vmul.f32 %v109, 0.5
    %v114 = vmul.f32 %v110, 0.5
    %v115 = vmul.f32 %v111, 0.5
    %v116 = vmul.f32 %v73, %v112
    %v117 = vmul.f32 %v76, %v113
    %v118 = vmul.f32 %v79, %v114
    %v119 = vmul.f32 %v82, %v115
    %v120 = vld [vmem:[#allocation2] sm:$0xff]
    %v121 = vld [vmem:[#allocation2 + $0x8] sm:$0xff]
    %v122 = vld [vmem:[#allocation2 + $0x10] sm:$0xff]
    %v123 = vld [vmem:[#allocation2 + $0x18] sm:$0xff]
    %v124 = vld [vmem:[%s3] sm:$0xff]
    %v125 = vld [vmem:[%s3 + $0x8] sm:$0xff]
    %v126 = vld [vmem:[%s3 + $0x10] sm:$0xff]
    %v127 = vld [vmem:[%s3 + $0x18] sm:$0xff]
    %v128 = vld [vmem:[%s3 + $0x20] sm:$0xff]
    %v129 = vld [vmem:[%s3 + $0x28] sm:$0xff]
    %v130 = vld [vmem:[%s3 + $0x30] sm:$0xff]
    %v131 = vld [vmem:[%s3 + $0x38] sm:$0xff]
    %v132 = vld [vmem:[%s3 + $0x40] sm:$0xff]
    %v133 = vld [vmem:[%s3 + $0x48] sm:$0xff]
    %v134 = vld [vmem:[%s3 + $0x50] sm:$0xff]
    %v135 = vld [vmem:[%s3 + $0x58] sm:$0xff]
    %v136 = vld [vmem:[%s3 + $0x60] sm:$0xff]
    %v137 = vld [vmem:[%s3 + $0x68] sm:$0xff]
    %v138 = vld [vmem:[%s3 + $0x70] sm:$0xff]
    %v139 = vld [vmem:[%s3 + $0x78] sm:$0xff]
    %140 = vmatpush.msra.mxu0 %v139
    %141 = vmatpush.msra.mxu0 %v138
    %142 = vmatpush.msra.mxu0 %v137
    %143 = vmatpush.msra.mxu0 %v136
    %144 = vmatpush.msra.mxu0 %v135
    %145 = vmatpush.msra.mxu0 %v134
    %146 = vmatpush.msra.mxu0 %v133
    %147 = vmatpush.msra.mxu0 %v132
    %148 = vmatpush.msra.mxu0 %v131
    %149 = vmatpush.msra.mxu0 %v130
    %150 = vmatpush.msra.mxu0 %v129
    %151 = vmatpush.msra.mxu0 %v128
    %152 = vmatpush.msra.mxu0 %v127
    %153 = vmatpush.msra.mxu0 %v126
    %154 = vmatpush.msra.mxu0 %v125
    %155 = vmatpush.msra.mxu0 %v124
    %156 = vmatmul.f32.gmra.mxu0 %v116
    %v157 = vpop.f32.mrf.mxu0
    %v158 = vadd.f32 0.0, %v157
    %159 = vmatmul.f32.gmra.mxu0 %v117
    %v160 = vpop.f32.mrf.mxu0
    %v161 = vadd.f32 0.0, %v160
    %162 = vmatmul.f32.gmra.mxu0 %v118
    %v163 = vpop.f32.mrf.mxu0
    %v164 = vadd.f32 0.0, %v163
    %165 = vmatmul.f32.gmra.mxu0 %v119
    %v166 = vpop.f32.mrf.mxu0
    %v167 = vadd.f32 0.0, %v166
    %168 = vdwg.mxu0
    %v169 = vadd.f32 %v120, %v158
    %v170 = vadd.f32 %v121, %v161
    %v171 = vadd.f32 %v122, %v164
    %v172 = vadd.f32 %v123, %v167
    %173 = vst.msk [vmem:[#allocation2] sm:$0xff] %vm42, %v169
    %174 = vst.msk [vmem:[#allocation2 + $0x8] sm:$0xff] %vm42, %v170
    %175 = vst.msk [vmem:[#allocation2 + $0x10] sm:$0xff] %vm42, %v171
    %176 = vst.msk [vmem:[#allocation2 + $0x18] sm:$0xff] %vm42, %v172
    // Predicated region
    $region26: #{tpu_custom_call.1} parent=1 // pred_check
      %p177 = pneg %p21
    $region27: #{tpu_custom_call.1} parent=1 // pred_check_branch
      %179 = sbr.rel (%p177) target = $region29
    $region28: #{tpu_custom_call.1} parent=1 // pred_region
      %v180 = vld [vmem:[#allocation2] sm:$0xff]
      %v181 = vld [vmem:[#allocation2 + $0x8] sm:$0xff]
      %v182 = vld [vmem:[#allocation2 + $0x10] sm:$0xff]
      %v183 = vld [vmem:[#allocation2 + $0x18] sm:$0xff]
      %v184 = vld [vmem:[%s4] sm:$0x1]
      %v186 = vperm.slane %v184, 0
      %v188 = vadd.f32 %v180, %v186
      %v189 = vadd.f32 %v181, %v186
      %v190 = vadd.f32 %v182, %v186
      %v191 = vadd.f32 %v183, %v186
      %192 = vst.msk [vmem:[#allocation3] sm:$0xff] %vm42, %v188
      %193 = vst.msk [vmem:[#allocation3 + $0x8] sm:$0xff] %vm42, %v189
      %194 = vst.msk [vmem:[#allocation3 + $0x10] sm:$0xff] %vm42, %v190
      %195 = vst.msk [vmem:[#allocation3 + $0x18] sm:$0xff] %vm42, %v191
    $region29: #{tpu_custom_call.1} parent=1 // pred_fallthru
      _
    // Predicated region
    $region30: #{tpu_custom_call.1} parent=1 // pred_check
      _
    $region31: #{tpu_custom_call.1} parent=1 // pred_check_branch
      %197 = sbr.rel (0) target = $region33
    $region32: #{tpu_custom_call.1} parent=1 // pred_region
      %199 = vsyncadd [#allocation4], 0
      %s200 = sshll.u32 [#allocation3], 4
      %s201 = int_to_ptr.vmem [resolvable:$true] %s200
      %s202 = sshll.u32 %s5, 4
      %s203 = int_to_ptr.hbm [resolvable:$true] %s202
      %208 = dma.vmem_to_hbm [thread:$0]  %s201, 512, %s203, [#allocation4], 128, 128, 8
    $region33: #{tpu_custom_call.1} parent=1 // pred_fallthru
      _
    // Predicated region
    $region34: #{tpu_custom_call.1} parent=1 // pred_check
      _
    $region35: #{tpu_custom_call.1} parent=1 // pred_check_branch
      %210 = sbr.rel (0) target = $region37
    $region36: #{tpu_custom_call.1} parent=1 // pred_region
      %212 = dma.done [#allocation4], 512
    $region37: #{tpu_custom_call.1} parent=1 // pred_fallthru
      _
    %213 = vsyncpa [#allocation4], 1

</llo_original>
